<compile_context>
chip_gen: v7x
topology: tpu7x:2x2x1
jax: 0.10.0
libtpu: 0.0.40
codegen_flags: <defaults>
</compile_context>

<pallas_src>
import jax
import jax.numpy as jnp
from jax.experimental import pallas as pl
from jax.experimental.pallas import tpu as pltpu

_MiB = 1024 * 1024


def _permute_copy_kernel(idx_ref, x_ref, o_ref):
    # idx_ref (SMEM, scalar prefetch) is consumed only by the BlockSpec
    # index_maps; the body just moves the selected (N, 1, s_tile, 128) slab.
    del idx_ref
    o_ref[...] = x_ref[...]


def _vmem_capacity_bytes():
    """Physical VMEM per TensorCore; conservative (v7x-sized) default on failure."""
    try:
        return int(pltpu.get_tpu_info().vmem_capacity_bytes)
    except Exception:
        return 64 * _MiB


def permute_channels(z, idx):
    """out[:, c] = z[:, idx[c]] (NCHW channel gather) via a Pallas copy kernel."""
    N, C, H, W = z.shape
    hw = H * W
    idx = idx.astype(jnp.int32)
    itemsize = jnp.dtype(z.dtype).itemsize

    # Generation-aware sizing: bigger blocks on 128-MiB-VMEM chips (v5e/v6e),
    # smaller on v7x (64 MiB physical).  Pipeline = 2 in + 2 out buffers.
    vmem_cap = _vmem_capacity_bytes()
    if vmem_cap >= 96 * _MiB:        # v5e / v6e
        max_block_bytes = 8 * _MiB
        vmem_cap_limit = 64 * _MiB
    else:                            # v7x
        max_block_bytes = 4 * _MiB
        vmem_cap_limit = 48 * _MiB

    # Lane-dense view of the spatial axis: (rows, 128).  Pad hw to a multiple
    # of 128 if needed (rare for image flows; costs one extra HBM round trip).
    hw_pad = ((hw + 127) // 128) * 128
    z3 = z.reshape(N, C, hw)
    if hw_pad != hw:
        # TODO(synk): for huge C with tiny H*W (per-channel slab << 512 KiB) a
        # grouped manual-DMA path (memory_space=pl.ANY + make_async_copy ring)
        # would avoid both the padding copy and per-step grid overhead.
        z3 = jnp.pad(z3, ((0, 0), (0, 0), (0, hw_pad - hw)))
    rows = hw_pad // 128
    z4 = z3.reshape(N, C, rows, 128)

    # Spatial tile: largest multiple-of-8 row count within the block budget
    # (full extent if it already fits).  Tail block (if rows % s_tile != 0) is
    # handled by Pallas' masked partial block.
    row_bytes = N * 128 * itemsize
    budget_rows = max((max_block_bytes // row_bytes) // 8 * 8, 8)
    s_tile = min(budget_rows, rows)
    n_sp = pl.cdiv(rows, s_tile)
    block_bytes = N * s_tile * 128 * itemsize

    vmem_limit = int(min(max(6 * block_bytes, 32 * _MiB), vmem_cap_limit))

    out4 = pl.pallas_call(
        _permute_copy_kernel,
        out_shape=jax.ShapeDtypeStruct((N, C, rows, 128), z.dtype),
        grid_spec=pltpu.PrefetchScalarGridSpec(
            num_scalar_prefetch=1,
            grid=(C, n_sp),
            in_specs=[
                # Input channel chosen by the prefetched permutation indices;
                # trailing block dims (s_tile, 128) are sublane/lane dense.
                pl.BlockSpec(
                    (N, 1, s_tile, 128),
                    lambda c, s, idx_ref: (0, idx_ref[c], s, 0),
                ),
            ],
            out_specs=pl.BlockSpec(
                (N, 1, s_tile, 128),
                lambda c, s, idx_ref: (0, c, s, 0),
            ),
        ),
        compiler_params=pltpu.CompilerParams(
            dimension_semantics=("parallel", "parallel"),
            vmem_limit_bytes=vmem_limit,
        ),
        cost_estimate=pl.CostEstimate(
            flops=0,
            transcendentals=0,
            bytes_accessed=2 * N * C * hw_pad * itemsize,
        ),
    )(idx, z4)

    out3 = out4.reshape(N, C, hw_pad)
    if hw_pad != hw:
        out3 = out3[:, :, :hw]
    return out3.reshape(N, C, H, W)


class Permutation:
    """Channel-wise permutation layer (JAX/Pallas port of the PyTorch module)."""

    def __init__(self, size, key):
        # Stand-in for torch.randperm.
        self.p = jax.random.permutation(key, jnp.arange(size, dtype=jnp.int32))
        # Inverse permutation: p_inv[p] = arange(size)
        self.p_inv = jnp.zeros((size,), dtype=jnp.int32).at[self.p].set(
            jnp.arange(size, dtype=jnp.int32)
        )
        # Host-side validity check (init-time only): the kernel's gather
        # index_map does NOT bounds-check.
        assert bool(jnp.all(jnp.sort(self.p) == jnp.arange(size, dtype=jnp.int32))), \
            "p is not a valid permutation"

    def __call__(self, z, reverse=False):
        idx = self.p_inv if reverse else self.p
        return permute_channels(z, idx)


if __name__ == "__main__":
    key = jax.random.PRNGKey(0)
    k_perm, k_data, k_perm2, k_data2 = jax.random.split(key, 4)

    # --- main test: 128-aligned spatial extent (dense fast path) ---
    N, C, H, W = 2, 4, 16, 16
    layer = Permutation(C, k_perm)
    z = jax.random.normal(k_data, (N, C, H, W), dtype=jnp.float32)

    out_fwd = jax.block_until_ready(layer(z, reverse=False))
    ref_fwd = z[:, layer.p]
    assert jnp.array_equal(out_fwd, ref_fwd), "forward permutation mismatch"

    out_rev = jax.block_until_ready(layer(out_fwd, reverse=True))
    ref_rev = out_fwd[:, layer.p_inv]
    assert jnp.array_equal(out_rev, ref_rev), "reverse permutation mismatch"
    assert jnp.array_equal(out_rev, z), "round-trip (forward then reverse) mismatch"

    # --- secondary test: H*W not a multiple of 128 (padded path) ---
    N2, C2, H2, W2 = 2, 3, 5, 5
    layer2 = Permutation(C2, k_perm2)
    z2 = jax.random.normal(k_data2, (N2, C2, H2, W2), dtype=jnp.float32)
    out2 = jax.block_until_ready(layer2(z2, reverse=False))
    assert jnp.array_equal(out2, z2[:, layer2.p]), "padded-path permutation mismatch"
    back2 = jax.block_until_ready(layer2(out2, reverse=True))
    assert jnp.array_equal(back2, z2), "padded-path round-trip mismatch"

    print("KERNEL_OK")
</pallas_src>

<mosaic_0001>
module attributes {stable_mosaic.version = 11 : i64} {
  func.func @_permute_copy_kernel(%arg0: i32, %arg1: i32, %arg2: memref<4xi32, #tpu.memory_space<smem>>, %arg3: memref<2x1x2x128xf32, #tpu.memory_space<vmem>>, %arg4: memref<2x1x2x128xf32, #tpu.memory_space<vmem>>) attributes {dimension_semantics = [#tpu.dimension_semantics<parallel>, #tpu.dimension_semantics<parallel>], iteration_bounds = array<i64: 4, 1>, scalar_prefetch = 1 : i64, scratch_operands = 0 : i64, tpu.core_type = #tpu.core_type<tc>, window_params = [{transform_indices = @transform_0, window_bounds = array<i64: 2, 1, 2, 128>}, {transform_indices = @transform_1, window_bounds = array<i64: 2, 1, 2, 128>}]} {
    %c0 = arith.constant 0 : index
    %c0_0 = arith.constant 0 : index
    %c0_1 = arith.constant 0 : index
    %c0_2 = arith.constant 0 : index
    %0 = vector.load %arg3[%c0, %c0_0, %c0_1, %c0_2] : memref<2x1x2x128xf32, #tpu.memory_space<vmem>>, vector<2x1x2x128xf32>
    %c0_3 = arith.constant 0 : index
    %c0_4 = arith.constant 0 : index
    %c0_5 = arith.constant 0 : index
    %c0_6 = arith.constant 0 : index
    %1 = vector.load %arg4[%c0_3, %c0_4, %c0_5, %c0_6] : memref<2x1x2x128xf32, #tpu.memory_space<vmem>>, vector<2x1x2x128xf32>
    tpu.vector_store %arg4[%c0_3, %c0_4, %c0_5, %c0_6], %0 {strides = array<i32>} : memref<2x1x2x128xf32, #tpu.memory_space<vmem>>, vector<2x1x2x128xf32>,
    return
  }
  func.func @transform_0(%arg0: i32, %arg1: i32, %arg2: memref<4xi32, #tpu.memory_space<smem>>) -> (i32, i32, i32, i32) {
    %0 = arith.index_cast %arg0 : i32 to index
    %1 = memref.load %arg2[%0] : memref<4xi32, #tpu.memory_space<smem>>
    %c0_i32 = arith.constant 0 : i32
    %c0_i32_0 = arith.constant 0 : i32
    %c0_i32_1 = arith.constant 0 : i32
    return %c0_i32, %1, %arg1, %c0_i32_0 : i32, i32, i32, i32
  }
  func.func @transform_1(%arg0: i32, %arg1: i32, %arg2: memref<4xi32, #tpu.memory_space<smem>>) -> (i32, i32, i32, i32) {
    %c0_i32 = arith.constant 0 : i32
    %c0_i32_0 = arith.constant 0 : i32
    %c0_i32_1 = arith.constant 0 : i32
    return %c0_i32, %arg0, %arg1, %c0_i32_0 : i32, i32, i32, i32
  }
}

</mosaic_0001>

<llo_original>
// kernel: tpu_custom_call.1
$region0: #{tpu_custom_call.1}
  #allocation0 [shape = 'u32[]', space=smem, size = 0x4, offset = 0x4, fixed_abs, tag = 'smem constant byte address 0x4 - core index']
  #allocation1 [shape = 'u32[144,128]{1,0:T(1,128)}', space=vmem, size = 0x12000, scoped, tag = 'internal scratch']
  #allocation2 [shape = 's32[1]{0}', space=sflag, size = 0x4, scoped, tag = 'scoped memory for tpu_custom_call.1']
  #allocation3 [shape = 'u8[512]{0}', space=smem, size = 0x200, scoped, tag = 'prefetched SMEM operand 0']
  %s0 = inlined_call_operand.hbm [shape: s32[4], index: 0, kind: input, shape index: {}]
  %s1 = inlined_call_operand.hbm [shape: f32[2,4,2,128], index: 1, kind: input, shape index: {}]
  %s2 = inlined_call_operand.hbm [shape: f32[2,4,2,128], index: 2, kind: output, shape index: {}]
  %s3 = sld [smem:[#allocation0]]
  $region41: #{tpu_custom_call.1} parent=0
    _
  %s5 = ssub.s32 1, %s3
  %s6 = scalar_select 0, %s5, %s3
  %8 = dma.hbm_to_smem %s0, 16, [#allocation3], [#allocation2]
  %9 = dma.done [#allocation2], 16
  %10 = sfence
  $region1: #{tpu_custom_call.1} parent=0
    #allocation4 [shape = 'u8[4096]{0}', space=vmem, size = 0x1000, scoped, tag = 'input window, operand 1']
    #allocation5 [shape = 's32[2]{0}', space=sflag, size = 0x8, scoped, tag = 'scoped memory for tpu_custom_call.1']
    #allocation6 [shape = 's32[2]{0}', space=sflag, size = 0x8, scoped, tag = 'scoped memory for tpu_custom_call.1']
    #allocation7 [shape = 'u8[4096]{0}', space=vmem, size = 0x1000, scoped, tag = 'output window, operand 0']
    %11 = vsyncpa [#allocation5], 0
    %s12 = scalar_lea.sflag [#allocation5], 1
    %13 = vsyncpa %s12, 0
    %14 = vsyncpa [#allocation6], 0
    %s15 = scalar_lea.sflag [#allocation6], 1
    %16 = vsyncpa %s15, 0
    loop: start=0, step=1, limit=6
    $region2: #{tpu_custom_call.1} parent=1 // loop_pre_header
      _
    $region3: #{tpu_custom_call.1} parent=1 // loop_header
      %s18 = sphi 0, %s22
      %p19 = scmp.ge.s32.totalorder %s18, 6
      %s25 = sphi 0, %s37
      %s26 = sphi 0, %s33
      %s27 = sphi 0, %s25
      %s28 = sphi 0, %s26
      %s29 = sphi 0, %s27
      %s30 = sphi 0, %s28
      %s44 = sphi 0, %s46
      %s47 = sphi 0, %s44
      %s48 = sphi 0, %s47
      %s64 = sphi 0, %s48
      %s72 = sphi 0, %s74
      %s75 = sphi 0, %s72
      %s76 = sphi 0, %s75
      %s92 = sphi 0, %s76
    $region4: #{tpu_custom_call.1} parent=1 // loop_header_branch
      %21 = sbr.rel (%p19) target = $region8
    $region5: #{tpu_custom_call.1} parent=1 // loop_body
      %s23 = ssub.s32 %s18, 1
      %s24 = ssub.s32 %s18, 2
      %s31 = sadd.s32 1, %s26
      %p32 = scmp.ge.s32.totalorder %s31, 1
      %s33 = scalar_select %p32, 0, %s31
      %s34 = sadd.s32 1, %s25
      %s35 = scalar_select %p32, %s34, %s25
      %p36 = scmp.ge.s32.totalorder %s35, 4
      %s37 = scalar_select %p36, 0, %s35
      %s38 = sld [smem:[#allocation3 + %s25]]
      %s39 = sld [smem:[#allocation3 + %s37]]
      %s40 = ssub.s32 %s38, %s39
      %s41 = ssub.s32 %s26, %s33
      %s42 = sor.u32 %s40, %s41
      %p43 = scmp.eq.s32.totalorder %s42, 0
      %s45 = sadd.s32 %s44, 1
      %s46 = scalar_select %p43, %s44, %s45
      %p49 = pneg %p43
      %p50 = scmp.eq.s32.totalorder %s18, 3
      %p51 = por %p49, %p50
      %p52 = scmp.ne.s32.totalorder %s44, %s47
      %p53 = scmp.eq.s32.totalorder %s18, 0
      %p54 = por %p52, %p53
      %p55 = scmp.ne.s32.totalorder %s44, %s47
      %p56 = scmp.eq.s32.totalorder %s23, 3
      %p57 = por %p55, %p56
      %p58 = scmp.ne.s32.totalorder %s47, %s48
      %p59 = scmp.eq.s32.totalorder %s23, 0
      %p60 = por %p58, %p59
      %p61 = scmp.ne.s32.totalorder %s47, %s48
      %p62 = scmp.eq.s32.totalorder %s24, 3
      %p63 = por %p61, %p62
      %p65 = scmp.ne.s32.totalorder %s48, %s64
      %p66 = scmp.eq.s32.totalorder %s24, 0
      %p67 = por %p65, %p66
      %s68 = ssub.s32 %s25, %s37
      %s69 = ssub.s32 %s26, %s33
      %s70 = sor.u32 %s68, %s69
      %p71 = scmp.eq.s32.totalorder %s70, 0
      %s73 = sadd.s32 %s72, 1
      %s74 = scalar_select %p71, %s72, %s73
      %p77 = pneg %p71
      %p78 = scmp.eq.s32.totalorder %s18, 3
      %p79 = por %p77, %p78
      %p80 = scmp.ne.s32.totalorder %s72, %s75
      %p81 = scmp.eq.s32.totalorder %s18, 0
      %p82 = por %p80, %p81
      %p83 = scmp.ne.s32.totalorder %s72, %s75
      %p84 = scmp.eq.s32.totalorder %s23, 3
      %p85 = por %p83, %p84
      %p86 = scmp.ne.s32.totalorder %s75, %s76
      %p87 = scmp.eq.s32.totalorder %s23, 0
      %p88 = por %p86, %p87
      %p89 = scmp.ne.s32.totalorder %s75, %s76
      %p90 = scmp.eq.s32.totalorder %s24, 3
      %p91 = por %p89, %p90
      %p93 = scmp.ne.s32.totalorder %s76, %s92
      %p94 = scmp.eq.s32.totalorder %s24, 0
      %p95 = por %p93, %p94
      %p96 = scmp.le.s32.totalorder 1, %s18
      %p97 = scmp.lt.s32.totalorder %s18, 5
      %p98 = pnand %p96, %p97
      %p99 = pneg %p98
      // Predicated region
      $region9: #{tpu_custom_call.1} parent=5 // pred_check
        _
      $region10: #{tpu_custom_call.1} parent=5 // pred_check_branch
        %101 = sbr.rel (%p98) target = $region12
      $region11: #{tpu_custom_call.1} parent=5 // pred_region
        %s102 = ssub.s32 %s18, 1
      $region12: #{tpu_custom_call.1} parent=5 // pred_fallthru
        _
      %p103 = scmp.lt.s32.totalorder %s18, 4
      // Predicated region
      $region13: #{tpu_custom_call.1} parent=5 // pred_check
        %p104 = pneg %p103
      $region14: #{tpu_custom_call.1} parent=5 // pred_check_branch
        %106 = sbr.rel (%p104) target = $region16
      $region15: #{tpu_custom_call.1} parent=5 // pred_region
        // Predicated region
        $region17: #{tpu_custom_call.1} parent=15 // pred_check
          %p107 = pneg %p54
        $region18: #{tpu_custom_call.1} parent=15 // pred_check_branch
          %109 = sbr.rel (%p107) target = $region20
        $region19: #{tpu_custom_call.1} parent=15 // pred_region
          %s110 = sand.u32 %s44, 1
          %s111 = scalar_lea.sflag [#allocation5], %s110
          %s112 = sand.u32 %s44, 1
          %s113 = smul.addr %s112, 4
          %s114 = scalar_lea.vmem [#allocation4], %s113
          %s115 = sld [smem:[#allocation3 + %s25]]
          %s117 = ssub.s32 64, 64
          %118 = vsyncadd %s111, %s117
          %s119 = sadd.s32 %s26, %s115
          %s120 = smul.addr %s119, 32
          %s121 = scalar_lea.hbm %s1, %s120
          %s122 = sshll.u32 %s114, 4
          %s123 = int_to_ptr.vmem [resolvable:$true] %s122
          %128 = dma.hbm_to_vmem [thread:$0]  %s121, 64, %s123, %s111, 128, 32, 2
        $region20: #{tpu_custom_call.1} parent=15 // pred_fallthru
          _
      $region16: #{tpu_custom_call.1} parent=5 // pred_fallthru
        _
      %p129 = scmp.le.s32.totalorder 1, %s18
      %p130 = scmp.lt.s32.totalorder %s18, 5
      %p131 = pnand %p129, %p130
      %p132 = pneg %p131
      // Predicated region
      $region21: #{tpu_custom_call.1} parent=5 // pred_check
        _
      $region22: #{tpu_custom_call.1} parent=5 // pred_check_branch
        %134 = sbr.rel (%p131) target = $region24
      $region23: #{tpu_custom_call.1} parent=5 // pred_region
        %s135 = ssub.s32 %s18, 1
        %s136 = sand.u32 %s47, 1
        %s137 = scalar_lea.sflag [#allocation5], %s136
        %s138 = sand.u32 %s47, 1
        %s139 = smul.addr %s138, 4
        %s140 = scalar_lea.vmem [#allocation4], %s139
        // Predicated region
        $region25: #{tpu_custom_call.1} parent=23 // pred_check
          %p141 = pneg %p60
        $region26: #{tpu_custom_call.1} parent=23 // pred_check_branch
          %143 = sbr.rel (%p141) target = $region28
        $region27: #{tpu_custom_call.1} parent=23 // pred_region
          %144 = dma.done %s137, 64
        $region28: #{tpu_custom_call.1} parent=23 // pred_fallthru
          _
        %s145 = sand.u32 %s47, 1
        %s146 = scalar_lea.sflag [#allocation5], %s145
        %s147 = sand.u32 %s47, 1
        %s148 = smul.addr %s147, 4
        %s149 = scalar_lea.vmem [#allocation4], %s148
        %p150 = pneg %p60
        %p151 = pneg %p57
        %p152 = pneg %p88
        %p153 = pneg %p85
        %s154 = sand.u32 %s75, 1
        %s155 = scalar_lea.sflag [#allocation6], %s154
        %s156 = sand.u32 %s75, 1
        %s157 = smul.addr %s156, 4
        %s158 = scalar_lea.vmem [#allocation7], %s157
        %s159 = sld [smem:[#allocation3 + %s27]]
        %v160 = vld [vmem:[%s140] sm:$0x3]
        %v161 = vld [vmem:[%s140 + $0x2] sm:$0x3]
        %162 = vst [vmem:[%s158] sm:$0x3] %v160
        %163 = vst [vmem:[%s158 + $0x2] sm:$0x3] %v161
        %s164 = sand.u32 %s75, 1
        %s165 = scalar_lea.sflag [#allocation6], %s164
        %s166 = sand.u32 %s75, 1
        %s167 = smul.addr %s166, 4
        %s168 = scalar_lea.vmem [#allocation7], %s167
        // Predicated region
        $region29: #{tpu_custom_call.1} parent=23 // pred_check
          %p169 = pneg %p85
        $region30: #{tpu_custom_call.1} parent=23 // pred_check_branch
          %171 = sbr.rel (%p169) target = $region32
        $region31: #{tpu_custom_call.1} parent=23 // pred_region
          %s173 = ssub.s32 64, 64
          %174 = vsyncadd %s165, %s173
          %s175 = sadd.s32 %s28, %s27
          %s176 = smul.addr %s175, 32
          %s177 = scalar_lea.hbm %s2, %s176
          %s178 = sshll.u32 %s168, 4
          %s179 = int_to_ptr.vmem [resolvable:$true] %s178
          %184 = dma.vmem_to_hbm [thread:$0]  %s179, 64, %s177, %s165, 32, 128, 2
        $region32: #{tpu_custom_call.1} parent=23 // pred_fallthru
          _
      $region24: #{tpu_custom_call.1} parent=5 // pred_fallthru
        _
      %p185 = scmp.le.s32.totalorder 2, %s18
      // Predicated region
      $region33: #{tpu_custom_call.1} parent=5 // pred_check
        %p186 = pneg %p185
      $region34: #{tpu_custom_call.1} parent=5 // pred_check_branch
        %188 = sbr.rel (%p186) target = $region36
      $region35: #{tpu_custom_call.1} parent=5 // pred_region
        %s189 = ssub.s32 %s18, 2
        // Predicated region
        $region37: #{tpu_custom_call.1} parent=35 // pred_check
          %p190 = pneg %p91
        $region38: #{tpu_custom_call.1} parent=35 // pred_check_branch
          %192 = sbr.rel (%p190) target = $region40
        $region39: #{tpu_custom_call.1} parent=35 // pred_region
          %s193 = sand.u32 %s76, 1
          %s194 = scalar_lea.sflag [#allocation6], %s193
          %s195 = sand.u32 %s76, 1
          %s196 = smul.addr %s195, 4
          %s197 = scalar_lea.vmem [#allocation7], %s196
          %198 = dma.done %s194, 64
        $region40: #{tpu_custom_call.1} parent=35 // pred_fallthru
          _
      $region36: #{tpu_custom_call.1} parent=5 // pred_fallthru
        _
    $region6: #{tpu_custom_call.1} parent=1 // loop_footer
      %s22 = sadd.s32 1, %s18
    $region7: #{tpu_custom_call.1} parent=1 // loop_footer_branch
      %17 = sbr.rel target = $region3
    $region8: #{tpu_custom_call.1} parent=1 // loop_exit
      _
    %199 = vsyncpa [#allocation5], 1
    %s200 = scalar_lea.sflag [#allocation5], 1
    %201 = vsyncpa %s200, 1
    %202 = vsyncpa [#allocation6], 1
    %s203 = scalar_lea.sflag [#allocation6], 1
    %204 = vsyncpa %s203, 1

</llo_original>
